<compile_context>
chip_gen: v6e
topology: v6e:2x2x1
jax: 0.10.0
libtpu: 0.0.40
codegen_flags: <defaults>
</compile_context>

<pallas_src>
import functools

import jax
import jax.numpy as jnp
from jax.experimental import pallas as pl
from jax.experimental.pallas import tpu as pltpu


def _snn2_kernel(x_ref, w1_ref, wout_ref, out_ref, acc_ref, *, beta, threshold, T, B):
    # x_ref:   (T*B, I)   w1_ref: (I, H)   wout_ref: (H, O)
    # out_ref: (T*B, O)   acc_ref: VMEM scratch (T*B, H) holding beta-weighted spike
    #                     prefix sums (one row-block per timestep).

    # fc1 hoisted over all timesteps: one MXU pass with M = T*B (no time dependence).
    cur1_all = jnp.dot(x_ref[...], w1_ref[...],
                       preferred_element_type=jnp.float32)          # (T*B, H)

    H = cur1_all.shape[1]

    beta_f = jnp.float32(beta)
    thr_f = jnp.float32(threshold)
    one_f = jnp.float32(1.0)
    zero_f = jnp.float32(0.0)

    # Hidden-layer membrane and the beta-weighted spike accumulator live in registers.
    mem1 = jnp.zeros((B, H), jnp.float32)
    acc = jnp.zeros((B, H), jnp.float32)

    # T is a small compile-time constant -> fully unrolled, static slices, LLO-visible.
    for t in range(T):
        cur1 = cur1_all[t * B:(t + 1) * B, :]                        # (B, H) static slice

        # lif1: Leaky, reset_mechanism='zero'. Reset uses the PREVIOUS membrane,
        # spikes use the UPDATED membrane; both fused into single selects.
        mem1_prev = mem1
        mem1 = jnp.where(mem1_prev > thr_f, zero_f, beta_f * mem1_prev + cur1)
        spk1 = jnp.where(mem1 > thr_f, one_f, zero_f)

        # lif_out has no reset -> mem2_t = acc_t @ Wout with acc_t = beta*acc_{t-1} + spk1_t.
        acc = beta_f * acc + spk1
        acc_ref[t * B:(t + 1) * B, :] = acc                          # static-slice store

    # Single hoisted fc_out matmul over all timesteps + one dense slab store.
    out_ref[...] = jnp.dot(acc_ref[...], wout_ref[...],
                           preferred_element_type=jnp.float32)       # (T*B, O)


def snn2_forward(x, w1_t, wout_t, *, beta=0.96, threshold=1.0):
    """x: (T, B, I) float32; w1_t: (I, H); wout_t: (H, O). Returns (T, B, O)."""
    T, B, I = x.shape
    H = w1_t.shape[1]
    O = wout_t.shape[1]

    # Flatten time into the matmul M dimension (contiguous -> free reshape).
    x2d = x.reshape(T * B, I)

    kernel = functools.partial(_snn2_kernel, beta=beta, threshold=threshold, T=T, B=B)

    out2d = pl.pallas_call(
        kernel,
        out_shape=jax.ShapeDtypeStruct((T * B, O), jnp.float32),
        in_specs=[
            pl.BlockSpec(memory_space=pltpu.MemorySpace.VMEM),  # x (whole array)
            pl.BlockSpec(memory_space=pltpu.MemorySpace.VMEM),  # fc1 weight (I, H)
            pl.BlockSpec(memory_space=pltpu.MemorySpace.VMEM),  # fc_out weight (H, O)
        ],
        out_specs=pl.BlockSpec(memory_space=pltpu.MemorySpace.VMEM),
        scratch_shapes=[pltpu.VMEM((T * B, H), jnp.float32)],    # spike prefix sums
    )(x2d, w1_t, wout_t)

    return out2d.reshape(T, B, O)


def snn2_reference(x, w1_t, wout_t, *, beta=0.96, threshold=1.0):
    """Pure-JAX reference mirroring the snnTorch semantics."""
    T, B, _ = x.shape
    H = w1_t.shape[1]
    O = wout_t.shape[1]
    mem1 = jnp.zeros((B, H), jnp.float32)
    mem2 = jnp.zeros((B, O), jnp.float32)
    outs = []
    for t in range(T):
        cur1 = x[t] @ w1_t
        reset1 = (mem1 > threshold).astype(jnp.float32)
        mem1 = (beta * mem1 + cur1) * (1.0 - reset1)
        spk1 = (mem1 > threshold).astype(jnp.float32)
        cur2 = spk1 @ wout_t
        mem2 = beta * mem2 + cur2
        outs.append(mem2)
    return jnp.stack(outs)


if __name__ == "__main__":
    # Small, deterministic shapes consistent with the module defaults.
    T, B = 8, 2                 # window (time) = 8, batch = 2
    INPUT, HIDDEN, OUT = 96, 50, 2
    TAU = 0.96

    key = jax.random.PRNGKey(0)
    kx, k1, k2 = jax.random.split(key, 3)

    # Scale input so some neurons actually cross threshold (exercise reset path).
    x = 2.0 * jax.random.normal(kx, (T, B, INPUT), dtype=jnp.float32)

    # nn.Linear default init: U(-1/sqrt(fan_in), 1/sqrt(fan_in)); stored transposed.
    b1 = 1.0 / jnp.sqrt(jnp.float32(INPUT))
    b2 = 1.0 / jnp.sqrt(jnp.float32(HIDDEN))
    w1_t = jax.random.uniform(k1, (INPUT, HIDDEN), jnp.float32, -b1, b1)
    wout_t = jax.random.uniform(k2, (HIDDEN, OUT), jnp.float32, -b2, b2)

    out = snn2_forward(x, w1_t, wout_t, beta=TAU, threshold=1.0)
    out = jax.block_until_ready(out)

    ref = snn2_reference(x, w1_t, wout_t, beta=TAU, threshold=1.0)
    assert out.shape == (T, B, OUT), out.shape
    assert jnp.allclose(out, ref, atol=1e-5, rtol=1e-5), "mismatch vs reference"

    print("KERNEL_OK")
</pallas_src>

<mosaic_0001>
module attributes {stable_mosaic.version = 11 : i64} {
  func.func @_snn2_kernel(%arg0: memref<16x96xf32, #tpu.memory_space<vmem>>, %arg1: memref<96x50xf32, #tpu.memory_space<vmem>>, %arg2: memref<50x2xf32, #tpu.memory_space<vmem>>, %arg3: memref<16x2xf32, #tpu.memory_space<vmem>>, %arg4: memref<16x50xf32, #tpu.memory_space<vmem>>) attributes {dimension_semantics = [], scalar_prefetch = 0 : i64, scratch_operands = 1 : i64, tpu.core_type = #tpu.core_type<tc>} {
    %c0 = arith.constant 0 : index
    %c0_0 = arith.constant 0 : index
    %0 = vector.load %arg0[%c0, %c0_0] : memref<16x96xf32, #tpu.memory_space<vmem>>, vector<16x96xf32>
    %c0_1 = arith.constant 0 : index
    %c0_2 = arith.constant 0 : index
    %1 = vector.load %arg1[%c0_1, %c0_2] : memref<96x50xf32, #tpu.memory_space<vmem>>, vector<96x50xf32>
    %cst = arith.constant dense<0.000000e+00> : vector<16x50xf32>
    %2 = tpu.matmul %0, %1, %cst {dimension_numbers = #tpu.dot_dimension_numbers<[1], [0], [0], [1], [0, 0, 1, 1], [], []>} : vector<16x96xf32>, vector<96x50xf32>, vector<16x50xf32> -> vector<16x50xf32>
    %cst_3 = arith.constant 0.000000e+00 : f32
    %3 = vector.broadcast %cst_3 : f32 to vector<2x50xf32>
    %cst_4 = arith.constant 0.000000e+00 : f32
    %4 = vector.broadcast %cst_4 : f32 to vector<2x50xf32>
    %5 = vector.extract_strided_slice %2 {offsets = [0, 0], sizes = [2, 50], strides = [1, 1]} : vector<16x50xf32> to vector<2x50xf32>
    %cst_5 = arith.constant 1.000000e+00 : f32
    %6 = vector.broadcast %cst_5 : f32 to vector<2x50xf32>
    %7 = arith.cmpf ogt, %3, %6 : vector<2x50xf32>
    %cst_6 = arith.constant 0.959999978 : f32
    %8 = vector.broadcast %cst_6 : f32 to vector<2x50xf32>
    %9 = arith.mulf %8, %3 : vector<2x50xf32>
    %10 = arith.addf %9, %5 : vector<2x50xf32>
    %cst_7 = arith.constant 0.000000e+00 : f32
    %11 = vector.broadcast %cst_7 : f32 to vector<2x50xf32>
    %12 = arith.select %7, %11, %10 : vector<2x50xi1>, vector<2x50xf32>
    %cst_8 = arith.constant 1.000000e+00 : f32
    %13 = vector.broadcast %cst_8 : f32 to vector<2x50xf32>
    %14 = arith.cmpf ogt, %12, %13 : vector<2x50xf32>
    %cst_9 = arith.constant 1.000000e+00 : f32
    %cst_10 = arith.constant 0.000000e+00 : f32
    %15 = vector.broadcast %cst_9 : f32 to vector<2x50xf32>
    %16 = vector.broadcast %cst_10 : f32 to vector<2x50xf32>
    %17 = arith.select %14, %15, %16 : vector<2x50xi1>, vector<2x50xf32>
    %cst_11 = arith.constant 0.959999978 : f32
    %18 = vector.broadcast %cst_11 : f32 to vector<2x50xf32>
    %19 = arith.mulf %18, %4 : vector<2x50xf32>
    %20 = arith.addf %19, %17 : vector<2x50xf32>
    %c0_12 = arith.constant 0 : index
    %c0_13 = arith.constant 0 : index
    %21 = vector.load %arg4[%c0_12, %c0_13] : memref<16x50xf32, #tpu.memory_space<vmem>>, vector<2x50xf32>
    tpu.vector_store %arg4[%c0_12, %c0_13], %20 {strides = array<i32>} : memref<16x50xf32, #tpu.memory_space<vmem>>, vector<2x50xf32>,
    %22 = vector.extract_strided_slice %2 {offsets = [2, 0], sizes = [2, 50], strides = [1, 1]} : vector<16x50xf32> to vector<2x50xf32>
    %cst_14 = arith.constant 1.000000e+00 : f32
    %23 = vector.broadcast %cst_14 : f32 to vector<2x50xf32>
    %24 = arith.cmpf ogt, %12, %23 : vector<2x50xf32>
    %cst_15 = arith.constant 0.959999978 : f32
    %25 = vector.broadcast %cst_15 : f32 to vector<2x50xf32>
    %26 = arith.mulf %25, %12 : vector<2x50xf32>
    %27 = arith.addf %26, %22 : vector<2x50xf32>
    %cst_16 = arith.constant 0.000000e+00 : f32
    %28 = vector.broadcast %cst_16 : f32 to vector<2x50xf32>
    %29 = arith.select %24, %28, %27 : vector<2x50xi1>, vector<2x50xf32>
    %cst_17 = arith.constant 1.000000e+00 : f32
    %30 = vector.broadcast %cst_17 : f32 to vector<2x50xf32>
    %31 = arith.cmpf ogt, %29, %30 : vector<2x50xf32>
    %cst_18 = arith.constant 1.000000e+00 : f32
    %cst_19 = arith.constant 0.000000e+00 : f32
    %32 = vector.broadcast %cst_18 : f32 to vector<2x50xf32>
    %33 = vector.broadcast %cst_19 : f32 to vector<2x50xf32>
    %34 = arith.select %31, %32, %33 : vector<2x50xi1>, vector<2x50xf32>
    %cst_20 = arith.constant 0.959999978 : f32
    %35 = vector.broadcast %cst_20 : f32 to vector<2x50xf32>
    %36 = arith.mulf %35, %20 : vector<2x50xf32>
    %37 = arith.addf %36, %34 : vector<2x50xf32>
    %c2 = arith.constant 2 : index
    %c0_21 = arith.constant 0 : index
    %38 = vector.load %arg4[%c2, %c0_21] : memref<16x50xf32, #tpu.memory_space<vmem>>, vector<2x50xf32>
    tpu.vector_store %arg4[%c2, %c0_21], %37 {strides = array<i32>} : memref<16x50xf32, #tpu.memory_space<vmem>>, vector<2x50xf32>,
    %39 = vector.extract_strided_slice %2 {offsets = [4, 0], sizes = [2, 50], strides = [1, 1]} : vector<16x50xf32> to vector<2x50xf32>
    %cst_22 = arith.constant 1.000000e+00 : f32
    %40 = vector.broadcast %cst_22 : f32 to vector<2x50xf32>
    %41 = arith.cmpf ogt, %29, %40 : vector<2x50xf32>
    %cst_23 = arith.constant 0.959999978 : f32
    %42 = vector.broadcast %cst_23 : f32 to vector<2x50xf32>
    %43 = arith.mulf %42, %29 : vector<2x50xf32>
    %44 = arith.addf %43, %39 : vector<2x50xf32>
    %cst_24 = arith.constant 0.000000e+00 : f32
    %45 = vector.broadcast %cst_24 : f32 to vector<2x50xf32>
    %46 = arith.select %41, %45, %44 : vector<2x50xi1>, vector<2x50xf32>
    %cst_25 = arith.constant 1.000000e+00 : f32
    %47 = vector.broadcast %cst_25 : f32 to vector<2x50xf32>
    %48 = arith.cmpf ogt, %46, %47 : vector<2x50xf32>
    %cst_26 = arith.constant 1.000000e+00 : f32
    %cst_27 = arith.constant 0.000000e+00 : f32
    %49 = vector.broadcast %cst_26 : f32 to vector<2x50xf32>
    %50 = vector.broadcast %cst_27 : f32 to vector<2x50xf32>
    %51 = arith.select %48, %49, %50 : vector<2x50xi1>, vector<2x50xf32>
    %cst_28 = arith.constant 0.959999978 : f32
    %52 = vector.broadcast %cst_28 : f32 to vector<2x50xf32>
    %53 = arith.mulf %52, %37 : vector<2x50xf32>
    %54 = arith.addf %53, %51 : vector<2x50xf32>
    %c4 = arith.constant 4 : index
    %c0_29 = arith.constant 0 : index
    %55 = vector.load %arg4[%c4, %c0_29] : memref<16x50xf32, #tpu.memory_space<vmem>>, vector<2x50xf32>
    tpu.vector_store %arg4[%c4, %c0_29], %54 {strides = array<i32>} : memref<16x50xf32, #tpu.memory_space<vmem>>, vector<2x50xf32>,
    %56 = vector.extract_strided_slice %2 {offsets = [6, 0], sizes = [2, 50], strides = [1, 1]} : vector<16x50xf32> to vector<2x50xf32>
    %cst_30 = arith.constant 1.000000e+00 : f32
    %57 = vector.broadcast %cst_30 : f32 to vector<2x50xf32>
    %58 = arith.cmpf ogt, %46, %57 : vector<2x50xf32>
    %cst_31 = arith.constant 0.959999978 : f32
    %59 = vector.broadcast %cst_31 : f32 to vector<2x50xf32>
    %60 = arith.mulf %59, %46 : vector<2x50xf32>
    %61 = arith.addf %60, %56 : vector<2x50xf32>
    %cst_32 = arith.constant 0.000000e+00 : f32
    %62 = vector.broadcast %cst_32 : f32 to vector<2x50xf32>
    %63 = arith.select %58, %62, %61 : vector<2x50xi1>, vector<2x50xf32>
    %cst_33 = arith.constant 1.000000e+00 : f32
    %64 = vector.broadcast %cst_33 : f32 to vector<2x50xf32>
    %65 = arith.cmpf ogt, %63, %64 : vector<2x50xf32>
    %cst_34 = arith.constant 1.000000e+00 : f32
    %cst_35 = arith.constant 0.000000e+00 : f32
    %66 = vector.broadcast %cst_34 : f32 to vector<2x50xf32>
    %67 = vector.broadcast %cst_35 : f32 to vector<2x50xf32>
    %68 = arith.select %65, %66, %67 : vector<2x50xi1>, vector<2x50xf32>
    %cst_36 = arith.constant 0.959999978 : f32
    %69 = vector.broadcast %cst_36 : f32 to vector<2x50xf32>
    %70 = arith.mulf %69, %54 : vector<2x50xf32>
    %71 = arith.addf %70, %68 : vector<2x50xf32>
    %c6 = arith.constant 6 : index
    %c0_37 = arith.constant 0 : index
    %72 = vector.load %arg4[%c6, %c0_37] : memref<16x50xf32, #tpu.memory_space<vmem>>, vector<2x50xf32>
    tpu.vector_store %arg4[%c6, %c0_37], %71 {strides = array<i32>} : memref<16x50xf32, #tpu.memory_space<vmem>>, vector<2x50xf32>,
    %73 = vector.extract_strided_slice %2 {offsets = [8, 0], sizes = [2, 50], strides = [1, 1]} : vector<16x50xf32> to vector<2x50xf32>
    %cst_38 = arith.constant 1.000000e+00 : f32
    %74 = vector.broadcast %cst_38 : f32 to vector<2x50xf32>
    %75 = arith.cmpf ogt, %63, %74 : vector<2x50xf32>
    %cst_39 = arith.constant 0.959999978 : f32
    %76 = vector.broadcast %cst_39 : f32 to vector<2x50xf32>
    %77 = arith.mulf %76, %63 : vector<2x50xf32>
    %78 = arith.addf %77, %73 : vector<2x50xf32>
    %cst_40 = arith.constant 0.000000e+00 : f32
    %79 = vector.broadcast %cst_40 : f32 to vector<2x50xf32>
    %80 = arith.select %75, %79, %78 : vector<2x50xi1>, vector<2x50xf32>
    %cst_41 = arith.constant 1.000000e+00 : f32
    %81 = vector.broadcast %cst_41 : f32 to vector<2x50xf32>
    %82 = arith.cmpf ogt, %80, %81 : vector<2x50xf32>
    %cst_42 = arith.constant 1.000000e+00 : f32
    %cst_43 = arith.constant 0.000000e+00 : f32
    %83 = vector.broadcast %cst_42 : f32 to vector<2x50xf32>
    %84 = vector.broadcast %cst_43 : f32 to vector<2x50xf32>
    %85 = arith.select %82, %83, %84 : vector<2x50xi1>, vector<2x50xf32>
    %cst_44 = arith.constant 0.959999978 : f32
    %86 = vector.broadcast %cst_44 : f32 to vector<2x50xf32>
    %87 = arith.mulf %86, %71 : vector<2x50xf32>
    %88 = arith.addf %87, %85 : vector<2x50xf32>
    %c8 = arith.constant 8 : index
    %c0_45 = arith.constant 0 : index
    %89 = vector.load %arg4[%c8, %c0_45] : memref<16x50xf32, #tpu.memory_space<vmem>>, vector<2x50xf32>
    tpu.vector_store %arg4[%c8, %c0_45], %88 {strides = array<i32>} : memref<16x50xf32, #tpu.memory_space<vmem>>, vector<2x50xf32>,
    %90 = vector.extract_strided_slice %2 {offsets = [10, 0], sizes = [2, 50], strides = [1, 1]} : vector<16x50xf32> to vector<2x50xf32>
    %cst_46 = arith.constant 1.000000e+00 : f32
    %91 = vector.broadcast %cst_46 : f32 to vector<2x50xf32>
    %92 = arith.cmpf ogt, %80, %91 : vector<2x50xf32>
    %cst_47 = arith.constant 0.959999978 : f32
    %93 = vector.broadcast %cst_47 : f32 to vector<2x50xf32>
    %94 = arith.mulf %93, %80 : vector<2x50xf32>
    %95 = arith.addf %94, %90 : vector<2x50xf32>
    %cst_48 = arith.constant 0.000000e+00 : f32
    %96 = vector.broadcast %cst_48 : f32 to vector<2x50xf32>
    %97 = arith.select %92, %96, %95 : vector<2x50xi1>, vector<2x50xf32>
    %cst_49 = arith.constant 1.000000e+00 : f32
    %98 = vector.broadcast %cst_49 : f32 to vector<2x50xf32>
    %99 = arith.cmpf ogt, %97, %98 : vector<2x50xf32>
    %cst_50 = arith.constant 1.000000e+00 : f32
    %cst_51 = arith.constant 0.000000e+00 : f32
    %100 = vector.broadcast %cst_50 : f32 to vector<2x50xf32>
    %101 = vector.broadcast %cst_51 : f32 to vector<2x50xf32>
    %102 = arith.select %99, %100, %101 : vector<2x50xi1>, vector<2x50xf32>
    %cst_52 = arith.constant 0.959999978 : f32
    %103 = vector.broadcast %cst_52 : f32 to vector<2x50xf32>
    %104 = arith.mulf %103, %88 : vector<2x50xf32>
    %105 = arith.addf %104, %102 : vector<2x50xf32>
    %c10 = arith.constant 10 : index
    %c0_53 = arith.constant 0 : index
    %106 = vector.load %arg4[%c10, %c0_53] : memref<16x50xf32, #tpu.memory_space<vmem>>, vector<2x50xf32>
    tpu.vector_store %arg4[%c10, %c0_53], %105 {strides = array<i32>} : memref<16x50xf32, #tpu.memory_space<vmem>>, vector<2x50xf32>,
    %107 = vector.extract_strided_slice %2 {offsets = [12, 0], sizes = [2, 50], strides = [1, 1]} : vector<16x50xf32> to vector<2x50xf32>
    %cst_54 = arith.constant 1.000000e+00 : f32
    %108 = vector.broadcast %cst_54 : f32 to vector<2x50xf32>
    %109 = arith.cmpf ogt, %97, %108 : vector<2x50xf32>
    %cst_55 = arith.constant 0.959999978 : f32
    %110 = vector.broadcast %cst_55 : f32 to vector<2x50xf32>
    %111 = arith.mulf %110, %97 : vector<2x50xf32>
    %112 = arith.addf %111, %107 : vector<2x50xf32>
    %cst_56 = arith.constant 0.000000e+00 : f32
    %113 = vector.broadcast %cst_56 : f32 to vector<2x50xf32>
    %114 = arith.select %109, %113, %112 : vector<2x50xi1>, vector<2x50xf32>
    %cst_57 = arith.constant 1.000000e+00 : f32
    %115 = vector.broadcast %cst_57 : f32 to vector<2x50xf32>
    %116 = arith.cmpf ogt, %114, %115 : vector<2x50xf32>
    %cst_58 = arith.constant 1.000000e+00 : f32
    %cst_59 = arith.constant 0.000000e+00 : f32
    %117 = vector.broadcast %cst_58 : f32 to vector<2x50xf32>
    %118 = vector.broadcast %cst_59 : f32 to vector<2x50xf32>
    %119 = arith.select %116, %117, %118 : vector<2x50xi1>, vector<2x50xf32>
    %cst_60 = arith.constant 0.959999978 : f32
    %120 = vector.broadcast %cst_60 : f32 to vector<2x50xf32>
    %121 = arith.mulf %120, %105 : vector<2x50xf32>
    %122 = arith.addf %121, %119 : vector<2x50xf32>
    %c12 = arith.constant 12 : index
    %c0_61 = arith.constant 0 : index
    %123 = vector.load %arg4[%c12, %c0_61] : memref<16x50xf32, #tpu.memory_space<vmem>>, vector<2x50xf32>
    tpu.vector_store %arg4[%c12, %c0_61], %122 {strides = array<i32>} : memref<16x50xf32, #tpu.memory_space<vmem>>, vector<2x50xf32>,
    %124 = vector.extract_strided_slice %2 {offsets = [14, 0], sizes = [2, 50], strides = [1, 1]} : vector<16x50xf32> to vector<2x50xf32>
    %cst_62 = arith.constant 1.000000e+00 : f32
    %125 = vector.broadcast %cst_62 : f32 to vector<2x50xf32>
    %126 = arith.cmpf ogt, %114, %125 : vector<2x50xf32>
    %cst_63 = arith.constant 0.959999978 : f32
    %127 = vector.broadcast %cst_63 : f32 to vector<2x50xf32>
    %128 = arith.mulf %127, %114 : vector<2x50xf32>
    %129 = arith.addf %128, %124 : vector<2x50xf32>
    %cst_64 = arith.constant 0.000000e+00 : f32
    %130 = vector.broadcast %cst_64 : f32 to vector<2x50xf32>
    %131 = arith.select %126, %130, %129 : vector<2x50xi1>, vector<2x50xf32>
    %cst_65 = arith.constant 1.000000e+00 : f32
    %132 = vector.broadcast %cst_65 : f32 to vector<2x50xf32>
    %133 = arith.cmpf ogt, %131, %132 : vector<2x50xf32>
    %cst_66 = arith.constant 1.000000e+00 : f32
    %cst_67 = arith.constant 0.000000e+00 : f32
    %134 = vector.broadcast %cst_66 : f32 to vector<2x50xf32>
    %135 = vector.broadcast %cst_67 : f32 to vector<2x50xf32>
    %136 = arith.select %133, %134, %135 : vector<2x50xi1>, vector<2x50xf32>
    %cst_68 = arith.constant 0.959999978 : f32
    %137 = vector.broadcast %cst_68 : f32 to vector<2x50xf32>
    %138 = arith.mulf %137, %122 : vector<2x50xf32>
    %139 = arith.addf %138, %136 : vector<2x50xf32>
    %c14 = arith.constant 14 : index
    %c0_69 = arith.constant 0 : index
    %140 = vector.load %arg4[%c14, %c0_69] : memref<16x50xf32, #tpu.memory_space<vmem>>, vector<2x50xf32>
    tpu.vector_store %arg4[%c14, %c0_69], %139 {strides = array<i32>} : memref<16x50xf32, #tpu.memory_space<vmem>>, vector<2x50xf32>,
    %c0_70 = arith.constant 0 : index
    %c0_71 = arith.constant 0 : index
    %141 = vector.load %arg4[%c0_70, %c0_71] : memref<16x50xf32, #tpu.memory_space<vmem>>, vector<16x50xf32>
    %c0_72 = arith.constant 0 : index
    %c0_73 = arith.constant 0 : index
    %142 = vector.load %arg2[%c0_72, %c0_73] : memref<50x2xf32, #tpu.memory_space<vmem>>, vector<50x2xf32>
    %cst_74 = arith.constant dense<0.000000e+00> : vector<16x2xf32>
    %143 = tpu.matmul %141, %142, %cst_74 {dimension_numbers = #tpu.dot_dimension_numbers<[1], [0], [0], [1], [0, 0, 1, 1], [], []>} : vector<16x50xf32>, vector<50x2xf32>, vector<16x2xf32> -> vector<16x2xf32>
    %c0_75 = arith.constant 0 : index
    %c0_76 = arith.constant 0 : index
    %144 = vector.load %arg3[%c0_75, %c0_76] : memref<16x2xf32, #tpu.memory_space<vmem>>, vector<16x2xf32>
    tpu.vector_store %arg3[%c0_75, %c0_76], %143 {strides = array<i32>} : memref<16x2xf32, #tpu.memory_space<vmem>>, vector<16x2xf32>,
    return
  }
}

</mosaic_0001>

<llo_original>
// kernel: tpu_custom_call.1
$region0: #{tpu_custom_call.1}
  #allocation0 [shape = 'u32[]', space=smem, size = 0x4, offset = 0x4, fixed_abs, tag = 'smem constant byte address 0x4 - core index']
  #allocation1 [shape = 'u32[144,128]{1,0:T(1,128)}', space=vmem, size = 0x12000, scoped, tag = 'internal scratch']
  #allocation2 [shape = 'f32[16,50]{1,0:T(8,128)}', space=vmem, size = 0x2000, scoped, tag = 'scratch operand']
  %s0 = inlined_call_operand.vmem [shape: f32[16,96], index: 0, kind: input, shape index: {}]
  %s1 = inlined_call_operand.vmem [shape: f32[96,50], index: 1, kind: input, shape index: {}]
  %s2 = inlined_call_operand.vmem [shape: f32[50,2], index: 2, kind: input, shape index: {}]
  %s3 = inlined_call_operand.vmem [shape: f32[16,2], index: 3, kind: output, shape index: {}]
  %s4 = sld [smem:[#allocation0]]
  $region22: #{tpu_custom_call.1} parent=0
    _
  %s6 = ssub.s32 1, %s4
  %s7 = scalar_select 0, %s6, %s4
  // Predicated region
  $region2: #{tpu_custom_call.1} parent=0 // pred_check
    _
  $region3: #{tpu_custom_call.1} parent=0 // pred_check_branch
    %9 = sbr.rel (0) target = $region5
  $region4: #{tpu_custom_call.1} parent=0 // pred_region
    _
  $region5: #{tpu_custom_call.1} parent=0 // pred_fallthru
    _
  // Predicated region
  $region6: #{tpu_custom_call.1} parent=0 // pred_check
    _
  $region7: #{tpu_custom_call.1} parent=0 // pred_check_branch
    %11 = sbr.rel (0) target = $region9
  $region8: #{tpu_custom_call.1} parent=0 // pred_region
    _
  $region9: #{tpu_custom_call.1} parent=0 // pred_fallthru
    _
  // Predicated region
  $region10: #{tpu_custom_call.1} parent=0 // pred_check
    _
  $region11: #{tpu_custom_call.1} parent=0 // pred_check_branch
    %13 = sbr.rel (0) target = $region13
  $region12: #{tpu_custom_call.1} parent=0 // pred_region
    _
  $region13: #{tpu_custom_call.1} parent=0 // pred_fallthru
    _
  %v14 = vld [vmem:[%s0] sm:$0xff]
  %v15 = vld [vmem:[%s0 + $0x8] sm:$0xff]
  %v16 = vld [vmem:[%s1] sm:$0xff]
  %v17 = vld [vmem:[%s1 + $0x8] sm:$0xff]
  %v18 = vld [vmem:[%s1 + $0x10] sm:$0xff]
  %v19 = vld [vmem:[%s1 + $0x18] sm:$0xff]
  %v20 = vld [vmem:[%s1 + $0x20] sm:$0xff]
  %v21 = vld [vmem:[%s1 + $0x28] sm:$0xff]
  %v22 = vld [vmem:[%s1 + $0x30] sm:$0xff]
  %v23 = vld [vmem:[%s1 + $0x38] sm:$0xff]
  %v24 = vld [vmem:[%s1 + $0x40] sm:$0xff]
  %v25 = vld [vmem:[%s1 + $0x48] sm:$0xff]
  %v26 = vld [vmem:[%s1 + $0x50] sm:$0xff]
  %v27 = vld [vmem:[%s1 + $0x58] sm:$0xff]
  %vm28 = vcmask 785408
  %v30 = vsel %vm28, %v14, 0
  %v33 = vsel %vm28, %v15, 0
  %35 = vmatprep.subr.mxu0 0.0
  %36 = vmatpush1.msra.mxu0 0.0
  %37 = vmatprep.subr.mxu0 0.0
  %38 = vmatpush1.msra.mxu0 0.0
  %39 = vmatprep.subr.mxu0 0.0
  %40 = vmatpush1.msra.mxu0 0.0
  %41 = vmatprep.subr.mxu0 0.0
  %42 = vmatpush1.msra.mxu0 0.0
  %43 = vmatprep.subr.mxu0 0.0
  %44 = vmatpush1.msra.mxu0 %v27
  %45 = vmatprep.subr.mxu0 0.0
  %46 = vmatpush1.msra.mxu0 %v26
  %47 = vmatprep.subr.mxu0 0.0
  %48 = vmatpush1.msra.mxu0 %v25
  %49 = vmatprep.subr.mxu0 0.0
  %50 = vmatpush1.msra.mxu0 %v24
  %51 = vmatprep.subr.mxu0 0.0
  %52 = vmatpush1.msra.mxu0 %v23
  %53 = vmatprep.subr.mxu0 0.0
  %54 = vmatpush1.msra.mxu0 %v22
  %55 = vmatprep.subr.mxu0 0.0
  %56 = vmatpush1.msra.mxu0 %v21
  %57 = vmatprep.subr.mxu0 0.0
  %58 = vmatpush1.msra.mxu0 %v20
  %59 = vmatprep.subr.mxu0 0.0
  %60 = vmatpush1.msra.mxu0 %v19
  %61 = vmatprep.subr.mxu0 0.0
  %62 = vmatpush1.msra.mxu0 %v18
  %63 = vmatprep.subr.mxu0 0.0
  %64 = vmatpush1.msra.mxu0 %v17
  %65 = vmatprep.subr.mxu0 0.0
  %66 = vmatpush1.msra.mxu0 %v16
  %67 = vmatprep.subr.mxu0 0.0
  %68 = vmatpush2.msra.mxu0 0.0
  %69 = vmatprep.subr.mxu0 0.0
  %70 = vmatpush2.msra.mxu0 0.0
  %71 = vmatprep.subr.mxu0 0.0
  %72 = vmatpush2.msra.mxu0 0.0
  %73 = vmatprep.subr.mxu0 0.0
  %74 = vmatpush2.msra.mxu0 0.0
  %75 = vmatprep.subr.mxu0 0.0
  %76 = vmatpush2.msra.mxu0 0.0
  %77 = vmatprep.subr.mxu0 0.0
  %78 = vmatpush2.msra.mxu0 0.0
  %79 = vmatprep.subr.mxu0 0.0
  %80 = vmatpush2.msra.mxu0 0.0
  %81 = vmatprep.subr.mxu0 0.0
  %82 = vmatpush2.msra.mxu0 0.0
  %83 = vmatprep.subr.mxu0 0.0
  %84 = vmatpush2.msra.mxu0 0.0
  %85 = vmatprep.subr.mxu0 0.0
  %86 = vmatpush2.msra.mxu0 0.0
  %87 = vmatprep.subr.mxu0 0.0
  %88 = vmatpush2.msra.mxu0 0.0
  %89 = vmatprep.subr.mxu0 0.0
  %90 = vmatpush2.msra.mxu0 0.0
  %91 = vmatprep.subr.mxu0 0.0
  %92 = vmatpush2.msra.mxu0 0.0
  %93 = vmatprep.subr.mxu0 0.0
  %94 = vmatpush2.msra.mxu0 0.0
  %95 = vmatprep.subr.mxu0 0.0
  %96 = vmatpush2.msra.mxu0 0.0
  %97 = vmatprep.subr.mxu0 0.0
  %98 = vmatpush2.msra.mxu0 0.0
  %99 = vmatprep.mubr.f32.mxu0 0.0
  %100 = vmatmul.mubr.f32.gmra.mxu0 %v30
  %v101 = vpop.f32.mrf.mxu0
  %v102 = vadd.f32 0.0, %v101
  %v103 = vpop.f32.mrf.mxu0
  %104 = vmatprep.mubr.f32.mxu0 0.0
  %105 = vmatmul.mubr.f32.gmra.mxu0 %v33
  %v106 = vpop.f32.mrf.mxu0
  %v107 = vadd.f32 0.0, %v106
  %v108 = vpop.f32.mrf.mxu0
  %109 = vdwg.mxu0
  %vm110 = vcmp.gt.f32.partialorder 0.0, 1.0
  %v111 = vadd.f32 %v102, 0.0
  %v112 = vsel %vm110, 0.0, %v111
  %vm113 = vcmp.gt.f32.partialorder %v112, 1.0
  %v114 = vsel %vm113, 1.0, 0.0
  %v115 = vadd.f32 %v114, 0.0
  %vm116 = vcmask 402432
  %117 = vst.msk [vmem:[#allocation2] sm:$0x3] %vm116, %v115
  %v118 = vmul.f32 %v112, 0.96
  %v120 = vrot.slane %v102, 2
  %v122 = vadd.f32 %v118, %v120
  %v123 = vsel %vm113, 0.0, %v122
  %vm124 = vcmp.gt.f32.partialorder %v123, 1.0
  %v125 = vsel %vm124, 1.0, 0.0
  %v126 = vmul.f32 %v115, 0.96
  %v127 = vadd.f32 %v126, %v125
  %128 = vst.msk [vmem:[#allocation2 + $0x2] sm:$0x3] %vm116, %v127
  %v129 = vmul.f32 %v123, 0.96
  %v130 = vrot.slane %v102, 4
  %v132 = vadd.f32 %v129, %v130
  %v133 = vsel %vm124, 0.0, %v132
  %vm134 = vcmp.gt.f32.partialorder %v133, 1.0
  %v135 = vsel %vm134, 1.0, 0.0
  %v136 = vmul.f32 %v127, 0.96
  %v137 = vadd.f32 %v136, %v135
  %138 = vst.msk [vmem:[#allocation2 + $0x4] sm:$0x3] %vm116, %v137
  %v139 = vmul.f32 %v133, 0.96
  %v140 = vrot.slane %v102, 6
  %v142 = vadd.f32 %v139, %v140
  %v143 = vsel %vm134, 0.0, %v142
  %vm144 = vcmp.gt.f32.partialorder %v143, 1.0
  %v145 = vsel %vm144, 1.0, 0.0
  %v146 = vmul.f32 %v137, 0.96
  %v147 = vadd.f32 %v146, %v145
  %148 = vst.msk [vmem:[#allocation2 + $0x6] sm:$0x3] %vm116, %v147
  %v149 = vmul.f32 %v143, 0.96
  %v150 = vadd.f32 %v149, %v107
  %v151 = vsel %vm144, 0.0, %v150
  %vm152 = vcmp.gt.f32.partialorder %v151, 1.0
  %v153 = vsel %vm152, 1.0, 0.0
  %v154 = vmul.f32 %v147, 0.96
  %v155 = vadd.f32 %v154, %v153
  %156 = vst.msk [vmem:[#allocation2 + $0x8] sm:$0x3] %vm116, %v155
  %v157 = vmul.f32 %v151, 0.96
  %v159 = vrot.slane %v107, 2
  %v161 = vadd.f32 %v157, %v159
  %v162 = vsel %vm152, 0.0, %v161
  %vm163 = vcmp.gt.f32.partialorder %v162, 1.0
  %v164 = vsel %vm163, 1.0, 0.0
  %v165 = vmul.f32 %v155, 0.96
  %v166 = vadd.f32 %v165, %v164
  %167 = vst.msk [vmem:[#allocation2 + $0xa] sm:$0x3] %vm116, %v166
  %v168 = vmul.f32 %v162, 0.96
  %v169 = vrot.slane %v107, 4
  %v171 = vadd.f32 %v168, %v169
  %v172 = vsel %vm163, 0.0, %v171
  %vm173 = vcmp.gt.f32.partialorder %v172, 1.0
  %v174 = vsel %vm173, 1.0, 0.0
  %v175 = vmul.f32 %v166, 0.96
  %v176 = vadd.f32 %v175, %v174
  %177 = vst.msk [vmem:[#allocation2 + $0xc] sm:$0x3] %vm116, %v176
  %v178 = vmul.f32 %v172, 0.96
  %v179 = vrot.slane %v107, 6
  %v181 = vadd.f32 %v178, %v179
  %v182 = vsel %vm173, 0.0, %v181
  %vm183 = vcmp.gt.f32.partialorder %v182, 1.0
  %v184 = vsel %vm183, 1.0, 0.0
  %v185 = vmul.f32 %v176, 0.96
  %v186 = vadd.f32 %v185, %v184
  %187 = vst.msk [vmem:[#allocation2 + $0xe] sm:$0x3] %vm116, %v186
  %v188 = vld [vmem:[#allocation2] sm:$0xff]
  %v189 = vld [vmem:[#allocation2 + $0x8] sm:$0xff]
  %v190 = vld [vmem:[%s2] sm:$0xff]
  %v191 = vld [vmem:[%s2 + $0x8] sm:$0xff]
  %v192 = vld [vmem:[%s2 + $0x10] sm:$0xff]
  %v193 = vld [vmem:[%s2 + $0x18] sm:$0xff]
  %v194 = vld [vmem:[%s2 + $0x20] sm:$0xff]
  %v195 = vld [vmem:[%s2 + $0x28] sm:$0xff]
  %v196 = vld [vmem:[%s2 + $0x30] sm:$0x3]
  %vm197 = vcmask 408576
  %v199 = vsel %vm197, %v188, 0
  %v202 = vsel %vm197, %v189, 0
  %vm204 = vcmask 1041408
  %v206 = vsel %vm204, %v196, 0
  %208 = vmatprep.subr.mxu0 0.0
  %209 = vmatpush1.msra.mxu0 0.0
  %210 = vmatprep.subr.mxu0 0.0
  %211 = vmatpush1.msra.mxu0 0.0
  %212 = vmatprep.subr.mxu0 0.0
  %213 = vmatpush1.msra.mxu0 0.0
  %214 = vmatprep.subr.mxu0 0.0
  %215 = vmatpush1.msra.mxu0 0.0
  %216 = vmatprep.subr.mxu0 0.0
  %217 = vmatpush1.msra.mxu0 0.0
  %218 = vmatprep.subr.mxu0 0.0
  %219 = vmatpush1.msra.mxu0 0.0
  %220 = vmatprep.subr.mxu0 0.0
  %221 = vmatpush1.msra.mxu0 0.0
  %222 = vmatprep.subr.mxu0 0.0
  %223 = vmatpush1.msra.mxu0 0.0
  %224 = vmatprep.subr.mxu0 0.0
  %225 = vmatpush1.msra.mxu0 0.0
  %226 = vmatprep.subr.mxu0 0.0
  %227 = vmatpush1.msra.mxu0 %v206
  %228 = vmatprep.subr.mxu0 0.0
  %229 = vmatpush1.msra.mxu0 %v195
  %230 = vmatprep.subr.mxu0 0.0
  %231 = vmatpush1.msra.mxu0 %v194
  %232 = vmatprep.subr.mxu0 0.0
  %233 = vmatpush1.msra.mxu0 %v193
  %234 = vmatprep.subr.mxu0 0.0
  %235 = vmatpush1.msra.mxu0 %v192
  %236 = vmatprep.subr.mxu0 0.0
  %237 = vmatpush1.msra.mxu0 %v191
  %238 = vmatprep.subr.mxu0 0.0
  %239 = vmatpush1.msra.mxu0 %v190
  %240 = vmatprep.subr.mxu0 0.0
  %241 = vmatpush2.msra.mxu0 0.0
  %242 = vmatprep.subr.mxu0 0.0
  %243 = vmatpush2.msra.mxu0 0.0
  %244 = vmatprep.subr.mxu0 0.0
  %245 = vmatpush2.msra.mxu0 0.0
  %246 = vmatprep.subr.mxu0 0.0
  %247 = vmatpush2.msra.mxu0 0.0
  %248 = vmatprep.subr.mxu0 0.0
  %249 = vmatpush2.msra.mxu0 0.0
  %250 = vmatprep.subr.mxu0 0.0
  %251 = vmatpush2.msra.mxu0 0.0
  %252 = vmatprep.subr.mxu0 0.0
  %253 = vmatpush2.msra.mxu0 0.0
  %254 = vmatprep.subr.mxu0 0.0
  %255 = vmatpush2.msra.mxu0 0.0
  %256 = vmatprep.subr.mxu0 0.0
  %257 = vmatpush2.msra.mxu0 0.0
  %258 = vmatprep.subr.mxu0 0.0
  %259 = vmatpush2.msra.mxu0 0.0
  %260 = vmatprep.subr.mxu0 0.0
  %261 = vmatpush2.msra.mxu0 0.0
  %262 = vmatprep.subr.mxu0 0.0
  %263 = vmatpush2.msra.mxu0 0.0
  %264 = vmatprep.subr.mxu0 0.0
  %265 = vmatpush2.msra.mxu0 0.0
  %266 = vmatprep.subr.mxu0 0.0
  %267 = vmatpush2.msra.mxu0 0.0
  %268 = vmatprep.subr.mxu0 0.0
  %269 = vmatpush2.msra.mxu0 0.0
  %270 = vmatprep.subr.mxu0 0.0
  %271 = vmatpush2.msra.mxu0 0.0
  %272 = vmatprep.mubr.f32.mxu0 0.0
  %273 = vmatmul.mubr.f32.gmra.mxu0 %v199
  %v274 = vpop.f32.mrf.mxu0
  %v275 = vadd.f32 0.0, %v274
  %v276 = vpop.f32.mrf.mxu0
  %277 = vmatprep.mubr.f32.mxu0 0.0
  %278 = vmatmul.mubr.f32.gmra.mxu0 %v202
  %v279 = vpop.f32.mrf.mxu0
  %v280 = vadd.f32 0.0, %v279
  %v281 = vpop.f32.mrf.mxu0
  %282 = vdwg.mxu0
  %vm283 = vcmask 15360
  %284 = vst.msk [vmem:[%s3] sm:$0xff] %vm283, %v275
  %285 = vst.msk [vmem:[%s3 + $0x8] sm:$0xff] %vm283, %v280
  // Predicated region
  $region14: #{tpu_custom_call.1} parent=0 // pred_check
    _
  $region15: #{tpu_custom_call.1} parent=0 // pred_check_branch
    %287 = sbr.rel (0) target = $region17
  $region16: #{tpu_custom_call.1} parent=0 // pred_region
    _
  $region17: #{tpu_custom_call.1} parent=0 // pred_fallthru
    _
  // Predicated region
  $region18: #{tpu_custom_call.1} parent=0 // pred_check
    _
  $region19: #{tpu_custom_call.1} parent=0 // pred_check_branch
    %289 = sbr.rel (0) target = $region21
  $region20: #{tpu_custom_call.1} parent=0 // pred_region
    _
  $region21: #{tpu_custom_call.1} parent=0 // pred_fallthru
    _

</llo_original>
